<compile_context>
chip_gen: v5e
topology: v5e:2x2
jax: 0.10.0
libtpu: 0.0.40
codegen_flags: <defaults>
</compile_context>

<pallas_src>
import functools

import jax
import jax.numpy as jnp
from jax.experimental import pallas as pl
from jax.experimental.pallas import tpu as pltpu

EXPANSION = 4
BN_EPS = 1e-5
LANE = 128
VMEM_LIMIT = 32 * 1024 * 1024  # explicit scoped-VMEM budget, safe on v5e/v6e/v7x


def _round_up(x, m):
    return (x + m - 1) // m * m


def _pick_bm(M, want=512):
    """Biggest row tile that fits, but keep >=2 grid steps when cheap (v7x 2 TCs)."""
    bm = min(want, M)
    if bm == M and M >= 256 and (M // 2) % 8 == 0:
        bm = M // 2
    return bm


# ---------------------------------------------------------------------------
# Kernel A / C: fused matmul + BN scale/shift [+ residual branch] [+ ReLU]
# ---------------------------------------------------------------------------
def _mm_bn_kernel(*refs, relu, mode):
    if mode == "plain":
        x_ref, w_ref, s_ref, b_ref, o_ref = refs
        id_ref = wd_ref = sd_ref = bd_ref = None
    elif mode == "add":
        x_ref, w_ref, s_ref, b_ref, id_ref, o_ref = refs
        wd_ref = sd_ref = bd_ref = None
    else:  # "conv": residual branch has its own 1x1 conv + BN (downsample)
        x_ref, w_ref, s_ref, b_ref, id_ref, wd_ref, sd_ref, bd_ref, o_ref = refs

    y = jnp.dot(x_ref[...], w_ref[...], preferred_element_type=jnp.float32)
    y = y * s_ref[...] + b_ref[...]
    if mode == "add":
        y = y + id_ref[...].astype(jnp.float32)
    elif mode == "conv":
        yd = jnp.dot(id_ref[...], wd_ref[...], preferred_element_type=jnp.float32)
        y = y + yd * sd_ref[...] + bd_ref[...]
    if relu:
        y = jnp.maximum(y, 0.0)
    o_ref[...] = y.astype(o_ref.dtype)


def matmul_bn(x, w, scale, shift, *, identity=None, id_w=None, id_scale=None,
              id_shift=None, relu, out_dtype=jnp.bfloat16, block_m=512):
    """x: (M, K) bf16; w: (K, Cout) bf16; scale/shift: (1, Cout) f32.
    Optional identity (M, Kid) bf16 (+ optional id_w/id_scale/id_shift for the
    downsample branch).  Returns (M, Cout)."""
    M, K = x.shape
    Cout = w.shape[1]
    bm = _pick_bm(M, block_m)
    grid = (pl.cdiv(M, bm),)

    in_specs = [
        pl.BlockSpec((bm, K), lambda i: (i, 0)),
        # constant index_map -> weight/scale/shift blocks are DMA'd only once
        pl.BlockSpec((K, Cout), lambda i: (0, 0)),
        pl.BlockSpec((1, Cout), lambda i: (0, 0)),
        pl.BlockSpec((1, Cout), lambda i: (0, 0)),
    ]
    args = [x, w, scale, shift]
    mode = "plain"
    if identity is not None:
        Kid = identity.shape[1]
        in_specs.append(pl.BlockSpec((bm, Kid), lambda i: (i, 0)))
        args.append(identity)
        if id_w is not None:
            mode = "conv"
            in_specs += [
                pl.BlockSpec((Kid, Cout), lambda i: (0, 0)),
                pl.BlockSpec((1, Cout), lambda i: (0, 0)),
                pl.BlockSpec((1, Cout), lambda i: (0, 0)),
            ]
            args += [id_w, id_scale, id_shift]
        else:
            mode = "add"

    return pl.pallas_call(
        functools.partial(_mm_bn_kernel, relu=relu, mode=mode),
        out_shape=jax.ShapeDtypeStruct((M, Cout), out_dtype),
        grid=grid,
        in_specs=in_specs,
        out_specs=pl.BlockSpec((bm, Cout), lambda i: (i, 0)),
        compiler_params=pltpu.CompilerParams(
            dimension_semantics=("parallel",),
            vmem_limit_bytes=VMEM_LIMIT),
    )(*args)


# ---------------------------------------------------------------------------
# Kernel B: 3x3 conv (pad=1) + BN + ReLU, K-fused 9-tap matmul from a halo tile
# ---------------------------------------------------------------------------
def _conv3x3_bn_relu_kernel(xh_ref, w_ref, s_ref, b_ref, o_ref, *, br, W):
    cp = xh_ref.shape[-1]
    taps = []
    for dy in range(3):
        for dx in range(3):
            win = xh_ref[0, 0, dy:dy + br, dx:dx + W, :]   # (br, W, cp) bf16
            taps.append(win.reshape(br * W, cp))
    xt = jnp.concatenate(taps, axis=-1)                    # (br*W, 9*cp)
    y = jnp.dot(xt, w_ref[...], preferred_element_type=jnp.float32)
    y = y * s_ref[...] + b_ref[...]
    y = jnp.maximum(y, 0.0)
    o_ref[...] = y.reshape(1, br, W, -1).astype(o_ref.dtype)


def conv3x3_bn_relu(x_nhwc, w2, scale, shift, *, out_dtype=jnp.bfloat16):
    """x_nhwc: (N, H, W, Cp) bf16 (channel-padded); w2: (9*Cp, Cout) bf16 laid
    out tap-major (dy, dx, cin).  Returns (N, H, W, Cout)."""
    N, H, W, Cp = x_nhwc.shape
    Cout = w2.shape[1]
    br = 8 if H % 8 == 0 else H
    t_r = H // br

    xp = jnp.pad(x_nhwc, ((0, 0), (1, 1), (1, 1), (0, 0)))   # spatial zero pad
    # Explicit halo materialization: each row tile carries its own 2 halo rows so
    # a plain Blocked BlockSpec delivers it ((br+2)/br duplication, not 9x im2col).
    tiles = jnp.stack([xp[:, r * br: r * br + br + 2] for r in range(t_r)], axis=1)
    # tiles: (N, t_r, br+2, W+2, Cp)

    return pl.pallas_call(
        functools.partial(_conv3x3_bn_relu_kernel, br=br, W=W),
        out_shape=jax.ShapeDtypeStruct((N, H, W, Cout), out_dtype),
        grid=(N, t_r),
        in_specs=[
            pl.BlockSpec((1, 1, br + 2, W + 2, Cp), lambda n, r: (n, r, 0, 0, 0)),
            pl.BlockSpec((9 * Cp, Cout), lambda n, r: (0, 0)),
            pl.BlockSpec((1, Cout), lambda n, r: (0, 0)),
            pl.BlockSpec((1, Cout), lambda n, r: (0, 0)),
        ],
        out_specs=pl.BlockSpec((1, br, W, Cout), lambda n, r: (n, r, 0, 0)),
        compiler_params=pltpu.CompilerParams(
            dimension_semantics=("parallel", "parallel"),
            vmem_limit_bytes=VMEM_LIMIT),
    )(tiles, w2, scale, shift)


# ---------------------------------------------------------------------------
# JAX glue: BN folding, weight re-layout, avg-pool pre-reduction (thin XLA ops)
# ---------------------------------------------------------------------------
def fold_bn(gamma, beta, mean, var, cout_p, eps=BN_EPS):
    scale = gamma / jnp.sqrt(var + eps)
    shift = beta - mean * scale
    scale = jnp.pad(scale, (0, cout_p - scale.shape[0]))
    shift = jnp.pad(shift, (0, cout_p - shift.shape[0]))
    return (scale.reshape(1, -1).astype(jnp.float32),
            shift.reshape(1, -1).astype(jnp.float32))


def w_1x1_mat(w_oihw, cin_p, cout_p):  # torch (O, I, 1, 1) -> (cin_p, cout_p) bf16
    o, i = w_oihw.shape[0], w_oihw.shape[1]
    w = jnp.transpose(w_oihw[:, :, 0, 0], (1, 0))
    w = jnp.pad(w, ((0, cin_p - i), (0, cout_p - o)))
    return w.astype(jnp.bfloat16)


def w_3x3_mat(w_oihw, cin_p, cout_p):  # torch (O, I, 3, 3) -> (9*cin_p, cout_p) bf16
    o, i = w_oihw.shape[0], w_oihw.shape[1]
    w = jnp.transpose(w_oihw, (2, 3, 1, 0))                    # (3, 3, I, O)
    w = jnp.pad(w, ((0, 0), (0, 0), (0, cin_p - i), (0, cout_p - o)))
    return w.reshape(9 * cin_p, cout_p).astype(jnp.bfloat16)   # tap-major (dy, dx, cin)


def avgpool_nhwc(x, s):
    n, h, w, c = x.shape
    y = x.astype(jnp.float32).reshape(n, h // s, s, w // s, s, c).mean(axis=(2, 4))
    return y.astype(x.dtype)


# ---------------------------------------------------------------------------
# Bottleneck forward (wrapper takes NCHW like PyTorch, returns NCHW)
# ---------------------------------------------------------------------------
def bottleneck_forward(x_nchw, params, stride):
    x = jnp.transpose(x_nchw, (0, 2, 3, 1))            # NHWC, f32
    N, H, W, inplanes = x.shape
    planes = params["conv1_w"].shape[0]
    out_ch = planes * EXPANSION
    cin_p = _round_up(inplanes, LANE)
    pp = _round_up(planes, LANE)
    op = _round_up(out_ch, LANE)

    # bf16 activations (channel-padded to 128 lanes); f32 accumulation in-kernel.
    xb = jnp.pad(x, ((0, 0), (0, 0), (0, 0), (0, cin_p - inplanes))).astype(jnp.bfloat16)

    w1 = w_1x1_mat(params["conv1_w"], cin_p, pp)
    w2 = w_3x3_mat(params["conv2_w"], pp, pp)
    w3 = w_1x1_mat(params["conv3_w"], pp, op)
    s1, b1 = fold_bn(*params["bn1"], pp)
    s2, b2 = fold_bn(*params["bn2"], pp)
    s3, b3 = fold_bn(*params["bn3"], op)

    # conv1 (1x1) + bn1 + relu
    y1 = matmul_bn(xb.reshape(N * H * W, cin_p), w1, s1, b1, relu=True)
    y1 = y1.reshape(N, H, W, pp)

    # conv2 (3x3, pad=1) + bn2 + relu — single K-fused 9-tap matmul per halo tile
    y2 = conv3x3_bn_relu(y1, w2, s2, b2)

    # avgpool(stride): pre-averaged before the 1x1 matmuls (no weight replication)
    if stride > 1:
        Ho, Wo = H // stride, W // stride
        a = avgpool_nhwc(y2, stride)
        xid = avgpool_nhwc(xb, stride)
    else:
        Ho, Wo = H, W
        a = y2
        xid = xb
    a = a.reshape(N * Ho * Wo, pp)

    # conv3 (1x1) + bn3, fused with residual branch (downsample conv+bn or
    # identity), residual add and final relu — one kernel.
    if params["downsample"] is not None:
        wd_conv, bnd = params["downsample"]
        wd = w_1x1_mat(wd_conv, cin_p, op)
        sd, bd = fold_bn(*bnd, op)
        out = matmul_bn(a, w3, s3, b3,
                        identity=xid.reshape(N * Ho * Wo, cin_p),
                        id_w=wd, id_scale=sd, id_shift=bd,
                        relu=True, out_dtype=jnp.float32)
    else:
        # inplanes == planes*4 here, so cin_p == op and x is added directly.
        out = matmul_bn(a, w3, s3, b3,
                        identity=xid.reshape(N * Ho * Wo, op),
                        relu=True, out_dtype=jnp.float32)

    out = out.reshape(N, Ho, Wo, op)[..., :out_ch]
    return jnp.transpose(out, (0, 3, 1, 2))            # back to NCHW


# ---------------------------------------------------------------------------
# Pure-JAX f32 reference (for correctness check)
# ---------------------------------------------------------------------------
def ref_bottleneck(x_nchw, params, stride):
    x = jnp.transpose(x_nchw, (0, 2, 3, 1)).astype(jnp.float32)

    def conv(x, w_oihw, padding):
        w = jnp.transpose(w_oihw, (2, 3, 1, 0))  # HWIO
        return jax.lax.conv_general_dilated(
            x, w, (1, 1), padding, dimension_numbers=("NHWC", "HWIO", "NHWC"))

    def bn(x, p):
        gamma, beta, mean, var = p
        return (x - mean) / jnp.sqrt(var + BN_EPS) * gamma + beta

    def avgpool(x, s):
        if s == 1:
            return x
        n, h, w, c = x.shape
        return x.reshape(n, h // s, s, w // s, s, c).mean(axis=(2, 4))

    out = jax.nn.relu(bn(conv(x, params["conv1_w"], "VALID"), params["bn1"]))
    out = jax.nn.relu(bn(conv(out, params["conv2_w"], [(1, 1), (1, 1)]), params["bn2"]))
    out = avgpool(out, stride)
    out = bn(conv(out, params["conv3_w"], "VALID"), params["bn3"])
    if params["downsample"] is not None:
        wd, bnd = params["downsample"]
        identity = bn(conv(avgpool(x, stride), wd, "VALID"), bnd)
    else:
        identity = x
    out = jax.nn.relu(out + identity)
    return jnp.transpose(out, (0, 3, 1, 2))


# ---------------------------------------------------------------------------
# Deterministic parameter init (shapes from Bottleneck.__init__)
# ---------------------------------------------------------------------------
def init_params(key, inplanes, planes, stride):
    keys = jax.random.split(key, 8)

    def conv_w(k, o, i, kh, kw):
        return jax.random.normal(k, (o, i, kh, kw), jnp.float32) * 0.1

    def bn_p(k, c):
        k1, k2, k3, k4 = jax.random.split(k, 4)
        gamma = jax.random.uniform(k1, (c,), jnp.float32, 0.5, 1.5)
        beta = jax.random.normal(k2, (c,), jnp.float32) * 0.1
        mean = jax.random.normal(k3, (c,), jnp.float32) * 0.1
        var = jax.random.uniform(k4, (c,), jnp.float32, 0.5, 1.5)
        return (gamma, beta, mean, var)

    params = {
        "conv1_w": conv_w(keys[0], planes, inplanes, 1, 1),
        "bn1": bn_p(keys[1], planes),
        "conv2_w": conv_w(keys[2], planes, planes, 3, 3),
        "bn2": bn_p(keys[3], planes),
        "conv3_w": conv_w(keys[4], planes * EXPANSION, planes, 1, 1),
        "bn3": bn_p(keys[5], planes * EXPANSION),
    }
    if stride > 1 or inplanes != planes * EXPANSION:
        params["downsample"] = (
            conv_w(keys[6], planes * EXPANSION, inplanes, 1, 1),
            bn_p(keys[7], planes * EXPANSION),
        )
    else:
        params["downsample"] = None
    return params


if __name__ == "__main__":
    # Case 1: stride=2 with downsample branch (inplanes=16, planes=8 -> out 32)
    kx, kp = jax.random.split(jax.random.PRNGKey(0))
    N, inplanes, H, W = 2, 16, 16, 16
    planes, stride = 8, 2
    x = jax.random.normal(kx, (N, inplanes, H, W), jnp.float32)
    params = init_params(kp, inplanes, planes, stride)
    out = jax.block_until_ready(bottleneck_forward(x, params, stride))
    assert out.shape == (N, planes * EXPANSION, H // stride, W // stride)
    ref = ref_bottleneck(x, params, stride)
    err_max = float(jnp.max(jnp.abs(out - ref)))
    err_mean = float(jnp.mean(jnp.abs(out - ref)))
    # bf16 activations/weights (f32 accumulation) -> tolerances loosened vs f32.
    assert err_max < 0.25 and err_mean < 0.02, \
        f"stride=2 mismatch: max={err_max} mean={err_mean}"

    # Case 2: stride=1, no downsample (inplanes == planes*4 == 32)
    kx2, kp2 = jax.random.split(jax.random.PRNGKey(1))
    inplanes2, planes2, stride2 = 32, 8, 1
    x2 = jax.random.normal(kx2, (N, inplanes2, H, W), jnp.float32)
    params2 = init_params(kp2, inplanes2, planes2, stride2)
    out2 = jax.block_until_ready(bottleneck_forward(x2, params2, stride2))
    assert out2.shape == (N, planes2 * EXPANSION, H, W)
    ref2 = ref_bottleneck(x2, params2, stride2)
    err_max2 = float(jnp.max(jnp.abs(out2 - ref2)))
    err_mean2 = float(jnp.mean(jnp.abs(out2 - ref2)))
    assert err_max2 < 0.25 and err_mean2 < 0.02, \
        f"stride=1 mismatch: max={err_max2} mean={err_mean2}"

    print("KERNEL_OK")
</pallas_src>

<mosaic_0001>
module attributes {stable_mosaic.version = 11 : i64} {
  func.func @_mm_bn_kernel(%arg0: i32, %arg1: memref<256x128xbf16, #tpu.memory_space<vmem>>, %arg2: memref<128x128xbf16, #tpu.memory_space<vmem>>, %arg3: memref<1x128xf32, #tpu.memory_space<vmem>>, %arg4: memref<1x128xf32, #tpu.memory_space<vmem>>, %arg5: memref<256x128xbf16, #tpu.memory_space<vmem>>) attributes {dimension_semantics = [#tpu.dimension_semantics<parallel>], iteration_bounds = array<i64: 2>, scalar_prefetch = 0 : i64, scratch_operands = 0 : i64, tpu.core_type = #tpu.core_type<tc>, window_params = [{transform_indices = @transform_0, window_bounds = array<i64: 256, 128>}, {pipeline_mode = #tpu.pipeline_mode<synchronous>, transform_indices = @transform_1, window_bounds = array<i64: 128, 128>}, {pipeline_mode = #tpu.pipeline_mode<synchronous>, transform_indices = @transform_2, window_bounds = array<i64: 1, 128>}, {pipeline_mode = #tpu.pipeline_mode<synchronous>, transform_indices = @transform_3, window_bounds = array<i64: 1, 128>}, {transform_indices = @transform_4, window_bounds = array<i64: 256, 128>}]} {
    %c0 = arith.constant 0 : index
    %c0_0 = arith.constant 0 : index
    %0 = vector.load %arg1[%c0, %c0_0] : memref<256x128xbf16, #tpu.memory_space<vmem>>, vector<256x128xbf16>
    %c0_1 = arith.constant 0 : index
    %c0_2 = arith.constant 0 : index
    %1 = vector.load %arg2[%c0_1, %c0_2] : memref<128x128xbf16, #tpu.memory_space<vmem>>, vector<128x128xbf16>
    %cst = arith.constant dense<0.000000e+00> : vector<256x128xf32>
    %2 = tpu.matmul %0, %1, %cst {dimension_numbers = #tpu.dot_dimension_numbers<[1], [0], [0], [1], [0, 0, 1, 1], [], []>} : vector<256x128xbf16>, vector<128x128xbf16>, vector<256x128xf32> -> vector<256x128xf32>
    %c0_3 = arith.constant 0 : index
    %c0_4 = arith.constant 0 : index
    %3 = vector.load %arg3[%c0_3, %c0_4] : memref<1x128xf32, #tpu.memory_space<vmem>>, vector<1x128xf32>
    %4 = vector.broadcast %3 : vector<1x128xf32> to vector<256x128xf32>
    %5 = arith.mulf %2, %4 : vector<256x128xf32>
    %c0_5 = arith.constant 0 : index
    %c0_6 = arith.constant 0 : index
    %6 = vector.load %arg4[%c0_5, %c0_6] : memref<1x128xf32, #tpu.memory_space<vmem>>, vector<1x128xf32>
    %7 = vector.broadcast %6 : vector<1x128xf32> to vector<256x128xf32>
    %8 = arith.addf %5, %7 : vector<256x128xf32>
    %cst_7 = arith.constant 0.000000e+00 : f32
    %9 = vector.broadcast %cst_7 : f32 to vector<256x128xf32>
    %10 = arith.maximumf %8, %9 : vector<256x128xf32>
    %11 = arith.truncf %10 : vector<256x128xf32> to vector<256x128xbf16>
    %c0_8 = arith.constant 0 : index
    %c0_9 = arith.constant 0 : index
    %12 = vector.load %arg5[%c0_8, %c0_9] : memref<256x128xbf16, #tpu.memory_space<vmem>>, vector<256x128xbf16>
    tpu.vector_store %arg5[%c0_8, %c0_9], %11 {strides = array<i32>} : memref<256x128xbf16, #tpu.memory_space<vmem>>, vector<256x128xbf16>,
    return
  }
  func.func @transform_0(%arg0: i32) -> (i32, i32) {
    %c0_i32 = arith.constant 0 : i32
    %c0_i32_0 = arith.constant 0 : i32
    return %arg0, %c0_i32 : i32, i32
  }
  func.func @transform_1(%arg0: i32) -> (i32, i32) {
    %c0_i32 = arith.constant 0 : i32
    %c0_i32_0 = arith.constant 0 : i32
    %c0_i32_1 = arith.constant 0 : i32
    return %c0_i32, %c0_i32_0 : i32, i32
  }
  func.func @transform_2(%arg0: i32) -> (i32, i32) {
    %c0_i32 = arith.constant 0 : i32
    %c0_i32_0 = arith.constant 0 : i32
    %c0_i32_1 = arith.constant 0 : i32
    return %c0_i32, %c0_i32_0 : i32, i32
  }
  func.func @transform_3(%arg0: i32) -> (i32, i32) {
    %c0_i32 = arith.constant 0 : i32
    %c0_i32_0 = arith.constant 0 : i32
    %c0_i32_1 = arith.constant 0 : i32
    return %c0_i32, %c0_i32_0 : i32, i32
  }
  func.func @transform_4(%arg0: i32) -> (i32, i32) {
    %c0_i32 = arith.constant 0 : i32
    %c0_i32_0 = arith.constant 0 : i32
    return %arg0, %c0_i32 : i32, i32
  }
}

</mosaic_0001>

<llo_original>
// kernel: tpu_custom_call.1
$region0: #{tpu_custom_call.1}
  #allocation0 [shape = 'u32[]', space=smem, size = 0x4, offset = 0x4, fixed_abs, tag = 'smem constant byte address 0x4 - core index']
  #allocation1 [shape = 'u32[72,128]{1,0:T(1,128)}', space=vmem, size = 0x9000, scoped, tag = 'internal scratch']
  %s0 = inlined_call_operand.hbm [shape: bf16[512,128], index: 0, kind: input, shape index: {}]
  %s1 = inlined_call_operand.hbm [shape: bf16[128,128], index: 1, kind: input, shape index: {}]
  %s2 = inlined_call_operand.vmem [shape: f32[1,128], index: 2, kind: input, shape index: {}]
  %s3 = inlined_call_operand.vmem [shape: f32[1,128], index: 3, kind: input, shape index: {}]
  %s4 = inlined_call_operand.hbm [shape: bf16[512,128], index: 4, kind: output, shape index: {}]
  %s5 = sld [smem:[#allocation0]]
  $region57: #{tpu_custom_call.1} parent=0
    _
  %s7 = ssub.s32 1, %s5
  %s8 = scalar_select 0, %s7, %s5
  $region1: #{tpu_custom_call.1} parent=0
    #allocation2 [shape = 'u8[131072]{0}', space=vmem, size = 0x20000, scoped, tag = 'input window, operand 0']
    #allocation3 [shape = 's32[2]{0}', space=sflag, size = 0x8, scoped, tag = 'scoped memory for tpu_custom_call.1']
    #allocation4 [shape = 's32[2]{0}', space=sflag, size = 0x8, scoped, tag = 'scoped memory for tpu_custom_call.1']
    #allocation5 [shape = 'u8[32768]{0}', space=vmem, size = 0x8000, scoped, tag = 'input window, operand 1, single buffered']
    #allocation6 [shape = 's32[1]{0}', space=sflag, size = 0x4, scoped, tag = 'scoped memory for tpu_custom_call.1']
    #allocation7 [shape = 'u8[131072]{0}', space=vmem, size = 0x20000, scoped, tag = 'output window, operand 0']
    %9 = vsyncpa [#allocation3], 0
    %s10 = scalar_lea.sflag [#allocation3], 1
    %11 = vsyncpa %s10, 0
    %12 = vsyncpa [#allocation6], 0
    %13 = vsyncpa [#allocation4], 0
    %s14 = scalar_lea.sflag [#allocation4], 1
    %15 = vsyncpa %s14, 0
    loop: start=0, step=1, limit=4
    $region2: #{tpu_custom_call.1} parent=1 // loop_pre_header
      _
    $region3: #{tpu_custom_call.1} parent=1 // loop_header
      %s17 = sphi 0, %s21
      %p18 = scmp.ge.s32.totalorder %s17, 4
      %s27 = sphi 0, %s29
      %s30 = sphi 0, %s27
      %s31 = sphi 0, %s30
      %s47 = sphi 0, %s31
      %s51 = sphi 0, %s51
      %s53 = sphi 0, %s51
      %s54 = sphi 0, %s53
      %s68 = sphi 0, %s54
      %s72 = sphi 0, %s72
      %s74 = sphi 0, %s72
      %s75 = sphi 0, %s74
      %s89 = sphi 0, %s75
      %s93 = sphi 0, %s93
      %s95 = sphi 0, %s93
      %s96 = sphi 0, %s95
      %s110 = sphi 0, %s96
      %s116 = sphi 0, %s118
      %s119 = sphi 0, %s116
      %s120 = sphi 0, %s119
      %s136 = sphi 0, %s120
    $region4: #{tpu_custom_call.1} parent=1 // loop_header_branch
      %20 = sbr.rel (%p18) target = $region8
    $region5: #{tpu_custom_call.1} parent=1 // loop_body
      %s22 = ssub.s32 %s17, 1
      %s23 = ssub.s32 %s17, 2
      %s24 = sadd.s32 %s17, 1
      %s25 = ssub.s32 %s17, %s24
      %p26 = scmp.eq.s32.totalorder %s25, 0
      %s28 = sadd.s32 %s27, 1
      %s29 = scalar_select %p26, %s27, %s28
      %p32 = pneg %p26
      %p33 = scmp.eq.s32.totalorder %s17, 1
      %p34 = por %p32, %p33
      %p35 = scmp.ne.s32.totalorder %s27, %s30
      %p36 = scmp.eq.s32.totalorder %s17, 0
      %p37 = por %p35, %p36
      %p38 = scmp.ne.s32.totalorder %s27, %s30
      %p39 = scmp.eq.s32.totalorder %s22, 1
      %p40 = por %p38, %p39
      %p41 = scmp.ne.s32.totalorder %s30, %s31
      %p42 = scmp.eq.s32.totalorder %s22, 0
      %p43 = por %p41, %p42
      %p44 = scmp.ne.s32.totalorder %s30, %s31
      %p45 = scmp.eq.s32.totalorder %s23, 1
      %p46 = por %p44, %p45
      %p48 = scmp.ne.s32.totalorder %s31, %s47
      %p49 = scmp.eq.s32.totalorder %s23, 0
      %p50 = por %p48, %p49
      %s52 = sadd.s32 %s51, 1
      %p55 = scmp.eq.s32.totalorder %s17, 1
      %p56 = scmp.ne.s32.totalorder %s51, %s53
      %p57 = scmp.eq.s32.totalorder %s17, 0
      %p58 = por %p56, %p57
      %p59 = scmp.ne.s32.totalorder %s51, %s53
      %p60 = scmp.eq.s32.totalorder %s22, 1
      %p61 = por %p59, %p60
      %p62 = scmp.ne.s32.totalorder %s53, %s54
      %p63 = scmp.eq.s32.totalorder %s22, 0
      %p64 = por %p62, %p63
      %p65 = scmp.ne.s32.totalorder %s53, %s54
      %p66 = scmp.eq.s32.totalorder %s23, 1
      %p67 = por %p65, %p66
      %p69 = scmp.ne.s32.totalorder %s54, %s68
      %p70 = scmp.eq.s32.totalorder %s23, 0
      %p71 = por %p69, %p70
      %s73 = sadd.s32 %s72, 1
      %p76 = scmp.eq.s32.totalorder %s17, 1
      %p77 = scmp.ne.s32.totalorder %s72, %s74
      %p78 = scmp.eq.s32.totalorder %s17, 0
      %p79 = por %p77, %p78
      %p80 = scmp.ne.s32.totalorder %s72, %s74
      %p81 = scmp.eq.s32.totalorder %s22, 1
      %p82 = por %p80, %p81
      %p83 = scmp.ne.s32.totalorder %s74, %s75
      %p84 = scmp.eq.s32.totalorder %s22, 0
      %p85 = por %p83, %p84
      %p86 = scmp.ne.s32.totalorder %s74, %s75
      %p87 = scmp.eq.s32.totalorder %s23, 1
      %p88 = por %p86, %p87
      %p90 = scmp.ne.s32.totalorder %s75, %s89
      %p91 = scmp.eq.s32.totalorder %s23, 0
      %p92 = por %p90, %p91
      %s94 = sadd.s32 %s93, 1
      %p97 = scmp.eq.s32.totalorder %s17, 1
      %p98 = scmp.ne.s32.totalorder %s93, %s95
      %p99 = scmp.eq.s32.totalorder %s17, 0
      %p100 = por %p98, %p99
      %p101 = scmp.ne.s32.totalorder %s93, %s95
      %p102 = scmp.eq.s32.totalorder %s22, 1
      %p103 = por %p101, %p102
      %p104 = scmp.ne.s32.totalorder %s95, %s96
      %p105 = scmp.eq.s32.totalorder %s22, 0
      %p106 = por %p104, %p105
      %p107 = scmp.ne.s32.totalorder %s95, %s96
      %p108 = scmp.eq.s32.totalorder %s23, 1
      %p109 = por %p107, %p108
      %p111 = scmp.ne.s32.totalorder %s96, %s110
      %p112 = scmp.eq.s32.totalorder %s23, 0
      %p113 = por %p111, %p112
      %s114 = ssub.s32 %s17, %s24
      %p115 = scmp.eq.s32.totalorder %s114, 0
      %s117 = sadd.s32 %s116, 1
      %s118 = scalar_select %p115, %s116, %s117
      %p121 = pneg %p115
      %p122 = scmp.eq.s32.totalorder %s17, 1
      %p123 = por %p121, %p122
      %p124 = scmp.ne.s32.totalorder %s116, %s119
      %p125 = scmp.eq.s32.totalorder %s17, 0
      %p126 = por %p124, %p125
      %p127 = scmp.ne.s32.totalorder %s116, %s119
      %p128 = scmp.eq.s32.totalorder %s22, 1
      %p129 = por %p127, %p128
      %p130 = scmp.ne.s32.totalorder %s119, %s120
      %p131 = scmp.eq.s32.totalorder %s22, 0
      %p132 = por %p130, %p131
      %p133 = scmp.ne.s32.totalorder %s119, %s120
      %p134 = scmp.eq.s32.totalorder %s23, 1
      %p135 = por %p133, %p134
      %p137 = scmp.ne.s32.totalorder %s120, %s136
      %p138 = scmp.eq.s32.totalorder %s23, 0
      %p139 = por %p137, %p138
      %p140 = scmp.le.s32.totalorder 1, %s17
      %p141 = scmp.lt.s32.totalorder %s17, 3
      %p142 = pnand %p140, %p141
      %p143 = pneg %p142
      // Predicated region
      $region9: #{tpu_custom_call.1} parent=5 // pred_check
        _
      $region10: #{tpu_custom_call.1} parent=5 // pred_check_branch
        %145 = sbr.rel (%p142) target = $region12
      $region11: #{tpu_custom_call.1} parent=5 // pred_region
        %s146 = ssub.s32 %s17, 1
        // Predicated region
        $region13: #{tpu_custom_call.1} parent=11 // pred_check
          %p147 = pneg %p64
        $region14: #{tpu_custom_call.1} parent=11 // pred_check_branch
          %149 = sbr.rel (%p147) target = $region16
        $region15: #{tpu_custom_call.1} parent=11 // pred_region
          %151 = vsyncadd [#allocation6], 0
          %s152 = sshll.u32 %s1, 4
          %s153 = int_to_ptr.hbm [resolvable:$true] %s152
          %s154 = sshll.u32 [#allocation5], 4
          %s155 = int_to_ptr.vmem [resolvable:$true] %s154
          %160 = dma.hbm_to_vmem [thread:$0]  %s153, 1024, %s155, [#allocation6], 64, 64, 4
        $region16: #{tpu_custom_call.1} parent=11 // pred_fallthru
          _
        // Predicated region
        $region17: #{tpu_custom_call.1} parent=11 // pred_check
          %p161 = pneg %p85
        $region18: #{tpu_custom_call.1} parent=11 // pred_check_branch
          %163 = sbr.rel (%p161) target = $region20
        $region19: #{tpu_custom_call.1} parent=11 // pred_region
          _
        $region20: #{tpu_custom_call.1} parent=11 // pred_fallthru
          _
        // Predicated region
        $region21: #{tpu_custom_call.1} parent=11 // pred_check
          %p164 = pneg %p106
        $region22: #{tpu_custom_call.1} parent=11 // pred_check_branch
          %166 = sbr.rel (%p164) target = $region24
        $region23: #{tpu_custom_call.1} parent=11 // pred_region
          _
        $region24: #{tpu_custom_call.1} parent=11 // pred_fallthru
          _
      $region12: #{tpu_custom_call.1} parent=5 // pred_fallthru
        _
      %p167 = scmp.lt.s32.totalorder %s17, 2
      // Predicated region
      $region25: #{tpu_custom_call.1} parent=5 // pred_check
        %p168 = pneg %p167
      $region26: #{tpu_custom_call.1} parent=5 // pred_check_branch
        %170 = sbr.rel (%p168) target = $region28
      $region27: #{tpu_custom_call.1} parent=5 // pred_region
        // Predicated region
        $region29: #{tpu_custom_call.1} parent=27 // pred_check
          %p171 = pneg %p37
        $region30: #{tpu_custom_call.1} parent=27 // pred_check_branch
          %173 = sbr.rel (%p171) target = $region32
        $region31: #{tpu_custom_call.1} parent=27 // pred_region
          %s174 = sand.u32 %s27, 1
          %s175 = scalar_lea.sflag [#allocation3], %s174
          %s176 = sand.u32 %s27, 1
          %s177 = smul.addr %s176, 128
          %s178 = scalar_lea.vmem [#allocation2], %s177
          %s179 = smul.u32 32, %s17
          %181 = vsyncadd %s175, 0
          %s182 = smul.addr %s179, 4
          %s183 = scalar_lea.hbm %s0, %s182
          %s184 = sshll.u32 %s183, 4
          %s185 = int_to_ptr.hbm [resolvable:$true] %s184
          %s186 = sshll.u32 %s178, 4
          %s187 = int_to_ptr.vmem [resolvable:$true] %s186
          %192 = dma.hbm_to_vmem [thread:$0]  %s185, 2048, %s187, %s175, 64, 64, 4
        $region32: #{tpu_custom_call.1} parent=27 // pred_fallthru
          _
      $region28: #{tpu_custom_call.1} parent=5 // pred_fallthru
        _
      %p193 = scmp.le.s32.totalorder 1, %s17
      %p194 = scmp.lt.s32.totalorder %s17, 3
      %p195 = pnand %p193, %p194
      %p196 = pneg %p195
      // Predicated region
      $region33: #{tpu_custom_call.1} parent=5 // pred_check
        _
      $region34: #{tpu_custom_call.1} parent=5 // pred_check_branch
        %198 = sbr.rel (%p195) target = $region36
      $region35: #{tpu_custom_call.1} parent=5 // pred_region
        %s199 = ssub.s32 %s17, 1
        %s200 = sand.u32 %s30, 1
        %s201 = scalar_lea.sflag [#allocation3], %s200
        %s202 = sand.u32 %s30, 1
        %s203 = smul.addr %s202, 128
        %s204 = scalar_lea.vmem [#allocation2], %s203
        // Predicated region
        $region37: #{tpu_custom_call.1} parent=35 // pred_check
          %p205 = pneg %p43
        $region38: #{tpu_custom_call.1} parent=35 // pred_check_branch
          %207 = sbr.rel (%p205) target = $region40
        $region39: #{tpu_custom_call.1} parent=35 // pred_region
          %209 = dma.done %s201, 2048
        $region40: #{tpu_custom_call.1} parent=35 // pred_fallthru
          _
        // Predicated region
        $region41: #{tpu_custom_call.1} parent=35 // pred_check
          %p210 = pneg %p64
        $region42: #{tpu_custom_call.1} parent=35 // pred_check_branch
          %212 = sbr.rel (%p210) target = $region44
        $region43: #{tpu_custom_call.1} parent=35 // pred_region
          %214 = dma.done [#allocation6], 1024
        $region44: #{tpu_custom_call.1} parent=35 // pred_fallthru
          _
        %s215 = sand.u32 %s30, 1
        %s216 = scalar_lea.sflag [#allocation3], %s215
        %s217 = sand.u32 %s30, 1
        %s218 = smul.addr %s217, 128
        %s219 = scalar_lea.vmem [#allocation2], %s218
        %p220 = pneg %p43
        %p221 = pneg %p40
        %p222 = pneg %p64
        %p223 = pneg %p61
        %p224 = pneg %p85
        %p225 = pneg %p82
        %p226 = pneg %p106
        %p227 = pneg %p103
        %p228 = pneg %p132
        %p229 = pneg %p129
        %s230 = sand.u32 %s119, 1
        %s231 = scalar_lea.sflag [#allocation4], %s230
        %s232 = sand.u32 %s119, 1
        %s233 = smul.addr %s232, 128
        %s234 = scalar_lea.vmem [#allocation7], %s233
        %s235 = smul.u32 32, %s22
        %s236 = smul.u32 32, %s22
        %v237 = vld [vmem:[%s204] sm:$0xf]
        %v238 = vld [vmem:[%s204 + $0x4] sm:$0xf]
        %v239 = vld [vmem:[%s204 + $0x8] sm:$0xf]
        %v240 = vld [vmem:[%s204 + $0xc] sm:$0xf]
        %v241 = vld [vmem:[%s204 + $0x10] sm:$0xf]
        %v242 = vld [vmem:[%s204 + $0x14] sm:$0xf]
        %v243 = vld [vmem:[%s204 + $0x18] sm:$0xf]
        %v244 = vld [vmem:[%s204 + $0x1c] sm:$0xf]
        %v245 = vld [vmem:[%s204 + $0x20] sm:$0xf]
        %v246 = vld [vmem:[%s204 + $0x24] sm:$0xf]
        %v247 = vld [vmem:[%s204 + $0x28] sm:$0xf]
        %v248 = vld [vmem:[%s204 + $0x2c] sm:$0xf]
        %v249 = vld [vmem:[%s204 + $0x30] sm:$0xf]
        %v250 = vld [vmem:[%s204 + $0x34] sm:$0xf]
        %v251 = vld [vmem:[%s204 + $0x38] sm:$0xf]
        %v252 = vld [vmem:[%s204 + $0x3c] sm:$0xf]
        %v253 = vld [vmem:[%s204 + $0x40] sm:$0xf]
        %v254 = vld [vmem:[%s204 + $0x44] sm:$0xf]
        %v255 = vld [vmem:[%s204 + $0x48] sm:$0xf]
        %v256 = vld [vmem:[%s204 + $0x4c] sm:$0xf]
        %v257 = vld [vmem:[%s204 + $0x50] sm:$0xf]
        %v258 = vld [vmem:[%s204 + $0x54] sm:$0xf]
        %v259 = vld [vmem:[%s204 + $0x58] sm:$0xf]
        %v260 = vld [vmem:[%s204 + $0x5c] sm:$0xf]
        %v261 = vld [vmem:[%s204 + $0x60] sm:$0xf]
        %v262 = vld [vmem:[%s204 + $0x64] sm:$0xf]
        %v263 = vld [vmem:[%s204 + $0x68] sm:$0xf]
        %v264 = vld [vmem:[%s204 + $0x6c] sm:$0xf]
        %v265 = vld [vmem:[%s204 + $0x70] sm:$0xf]
        %v266 = vld [vmem:[%s204 + $0x74] sm:$0xf]
        %v267 = vld [vmem:[%s204 + $0x78] sm:$0xf]
        %v268 = vld [vmem:[%s204 + $0x7c] sm:$0xf]
        %v269 = vld [vmem:[#allocation5] sm:$0xf]
        %v270 = vld [vmem:[#allocation5 + $0x4] sm:$0xf]
        %v271 = vld [vmem:[#allocation5 + $0x8] sm:$0xf]
        %v272 = vld [vmem:[#allocation5 + $0xc] sm:$0xf]
        %v273 = vld [vmem:[#allocation5 + $0x10] sm:$0xf]
        %v274 = vld [vmem:[#allocation5 + $0x14] sm:$0xf]
        %v275 = vld [vmem:[#allocation5 + $0x18] sm:$0xf]
        %v276 = vld [vmem:[#allocation5 + $0x1c] sm:$0xf]
        %v277 = vld [vmem:[#allocation5 + $0x20] sm:$0xf]
        %v278 = vld [vmem:[#allocation5 + $0x24] sm:$0xf]
        %v279 = vld [vmem:[#allocation5 + $0x28] sm:$0xf]
        %v280 = vld [vmem:[#allocation5 + $0x2c] sm:$0xf]
        %v281 = vld [vmem:[#allocation5 + $0x30] sm:$0xf]
        %v282 = vld [vmem:[#allocation5 + $0x34] sm:$0xf]
        %v283 = vld [vmem:[#allocation5 + $0x38] sm:$0xf]
        %v284 = vld [vmem:[#allocation5 + $0x3c] sm:$0xf]
        %v317 = vunpack.c.l.b16 %v237
        %v318 = vunpack.c.l.b16 %v238
        %v319 = vunpack.c.l.b16 %v239
        %v320 = vunpack.c.l.b16 %v240
        %v321 = vunpack.c.l.b16 %v241
        %v322 = vunpack.c.l.b16 %v242
        %v323 = vunpack.c.l.b16 %v243
        %v324 = vunpack.c.l.b16 %v244
        %v325 = vunpack.c.l.b16 %v245
        %v326 = vunpack.c.l.b16 %v246
        %v327 = vunpack.c.l.b16 %v247
        %v328 = vunpack.c.l.b16 %v248
        %v329 = vunpack.c.l.b16 %v249
        %v330 = vunpack.c.l.b16 %v250
        %v331 = vunpack.c.l.b16 %v251
        %v332 = vunpack.c.l.b16 %v252
        %v333 = vunpack.c.l.b16 %v253
        %v334 = vunpack.c.l.b16 %v254
        %v335 = vunpack.c.l.b16 %v255
        %v336 = vunpack.c.l.b16 %v256
        %v337 = vunpack.c.l.b16 %v257
        %v338 = vunpack.c.l.b16 %v258
        %v339 = vunpack.c.l.b16 %v259
        %v340 = vunpack.c.l.b16 %v260
        %v341 = vunpack.c.l.b16 %v261
        %v342 = vunpack.c.l.b16 %v262
        %v343 = vunpack.c.l.b16 %v263
        %v344 = vunpack.c.l.b16 %v264
        %v345 = vunpack.c.l.b16 %v265
        %v346 = vunpack.c.l.b16 %v266
        %v347 = vunpack.c.l.b16 %v267
        %v348 = vunpack.c.l.b16 %v268
        %v349 = vpack.c.b16 %v318, %v317
        %v350 = vpack.c.b16 %v320, %v319
        %v351 = vpack.c.b16 %v322, %v321
        %v352 = vpack.c.b16 %v324, %v323
        %v353 = vpack.c.b16 %v326, %v325
        %v354 = vpack.c.b16 %v328, %v327
        %v355 = vpack.c.b16 %v330, %v329
        %v356 = vpack.c.b16 %v332, %v331
        %v357 = vpack.c.b16 %v334, %v333
        %v358 = vpack.c.b16 %v336, %v335
        %v359 = vpack.c.b16 %v338, %v337
        %v360 = vpack.c.b16 %v340, %v339
        %v361 = vpack.c.b16 %v342, %v341
        %v362 = vpack.c.b16 %v344, %v343
        %v363 = vpack.c.b16 %v346, %v345
        %v364 = vpack.c.b16 %v348, %v347
        %v397 = vunpack.c.l.b16 %v269
        %v398 = vunpack.c.l.b16 %v270
        %v399 = vunpack.c.l.b16 %v271
        %v400 = vunpack.c.l.b16 %v272
        %v401 = vunpack.c.l.b16 %v273
        %v402 = vunpack.c.l.b16 %v274
        %v403 = vunpack.c.l.b16 %v275
        %v404 = vunpack.c.l.b16 %v276
        %v405 = vunpack.c.l.b16 %v277
        %v406 = vunpack.c.l.b16 %v278
        %v407 = vunpack.c.l.b16 %v279
        %v408 = vunpack.c.l.b16 %v280
        %v409 = vunpack.c.l.b16 %v281
        %v410 = vunpack.c.l.b16 %v282
        %v411 = vunpack.c.l.b16 %v283
        %v412 = vunpack.c.l.b16 %v284
        %v413 = vpack.c.b16 %v398, %v397
        %v414 = vpack.c.b16 %v400, %v399
        %v415 = vpack.c.b16 %v402, %v401
        %v416 = vpack.c.b16 %v404, %v403
        %v417 = vpack.c.b16 %v406, %v405
        %v418 = vpack.c.b16 %v408, %v407
        %v419 = vpack.c.b16 %v410, %v409
        %v420 = vpack.c.b16 %v412, %v411
        %429 = vmatpush.bf16.msra.mxu0 %v420
        %430 = vmatpush.bf16.msra.mxu0 %v419
        %431 = vmatpush.bf16.msra.mxu0 %v418
        %432 = vmatpush.bf16.msra.mxu0 %v417
        %433 = vmatpush.bf16.msra.mxu0 %v416
        %434 = vmatpush.bf16.msra.mxu0 %v415
        %435 = vmatpush.bf16.msra.mxu0 %v414
        %436 = vmatpush.bf16.msra.mxu0 %v413
        %437 = vmatmul.bf16.gmra.mxu0 %v349
        %v438 = vpop.f32.mrf.mxu0
        %v439 = vadd.f32 0.0, %v438
        %v440 = vpop.f32.mrf.mxu0
        %v441 = vadd.f32 0.0, %v440
        %442 = vmatmul.bf16.gmra.mxu0 %v350
        %v443 = vpop.f32.mrf.mxu0
        %v444 = vadd.f32 0.0, %v443
        %v445 = vpop.f32.mrf.mxu0
        %v446 = vadd.f32 0.0, %v445
        %447 = vmatmul.bf16.gmra.mxu0 %v351
        %v448 = vpop.f32.mrf.mxu0
        %v449 = vadd.f32 0.0, %v448
        %v450 = vpop.f32.mrf.mxu0
        %v451 = vadd.f32 0.0, %v450
        %452 = vmatmul.bf16.gmra.mxu0 %v352
        %v453 = vpop.f32.mrf.mxu0
        %v454 = vadd.f32 0.0, %v453
        %v455 = vpop.f32.mrf.mxu0
        %v456 = vadd.f32 0.0, %v455
        %457 = vmatmul.bf16.gmra.mxu0 %v353
        %v458 = vpop.f32.mrf.mxu0
        %v459 = vadd.f32 0.0, %v458
        %v460 = vpop.f32.mrf.mxu0
        %v461 = vadd.f32 0.0, %v460
        %462 = vmatmul.bf16.gmra.mxu0 %v354
        %v463 = vpop.f32.mrf.mxu0
        %v464 = vadd.f32 0.0, %v463
        %v465 = vpop.f32.mrf.mxu0
        %v466 = vadd.f32 0.0, %v465
        %467 = vmatmul.bf16.gmra.mxu0 %v355
        %v468 = vpop.f32.mrf.mxu0
        %v469 = vadd.f32 0.0, %v468
        %v470 = vpop.f32.mrf.mxu0
        %v471 = vadd.f32 0.0, %v470
        %472 = vmatmul.bf16.gmra.mxu0 %v356
        %v473 = vpop.f32.mrf.mxu0
        %v474 = vadd.f32 0.0, %v473
        %v475 = vpop.f32.mrf.mxu0
        %v476 = vadd.f32 0.0, %v475
        %477 = vmatmul.bf16.gmra.mxu0 %v357
        %v478 = vpop.f32.mrf.mxu0
        %v479 = vadd.f32 0.0, %v478
        %v480 = vpop.f32.mrf.mxu0
        %v481 = vadd.f32 0.0, %v480
        %482 = vmatmul.bf16.gmra.mxu0 %v358
        %v483 = vpop.f32.mrf.mxu0
        %v484 = vadd.f32 0.0, %v483
        %v485 = vpop.f32.mrf.mxu0
        %v486 = vadd.f32 0.0, %v485
        %487 = vmatmul.bf16.gmra.mxu0 %v359
        %v488 = vpop.f32.mrf.mxu0
        %v489 = vadd.f32 0.0, %v488
        %v490 = vpop.f32.mrf.mxu0
        %v491 = vadd.f32 0.0, %v490
        %492 = vmatmul.bf16.gmra.mxu0 %v360
        %v493 = vpop.f32.mrf.mxu0
        %v494 = vadd.f32 0.0, %v493
        %v495 = vpop.f32.mrf.mxu0
        %v496 = vadd.f32 0.0, %v495
        %497 = vmatmul.bf16.gmra.mxu0 %v361
        %v498 = vpop.f32.mrf.mxu0
        %v499 = vadd.f32 0.0, %v498
        %v500 = vpop.f32.mrf.mxu0
        %v501 = vadd.f32 0.0, %v500
        %502 = vmatmul.bf16.gmra.mxu0 %v362
        %v503 = vpop.f32.mrf.mxu0
        %v504 = vadd.f32 0.0, %v503
        %v505 = vpop.f32.mrf.mxu0
        %v506 = vadd.f32 0.0, %v505
        %507 = vmatmul.bf16.gmra.mxu0 %v363
        %v508 = vpop.f32.mrf.mxu0
        %v509 = vadd.f32 0.0, %v508
        %v510 = vpop.f32.mrf.mxu0
        %v511 = vadd.f32 0.0, %v510
        %512 = vmatmul.bf16.gmra.mxu0 %v364
        %v513 = vpop.f32.mrf.mxu0
        %v514 = vadd.f32 0.0, %v513
        %v515 = vpop.f32.mrf.mxu0
        %v516 = vadd.f32 0.0, %v515
        %517 = vdwg.mxu0
        %v518 = vld [vmem:[%s2] sm:$0x1]
        %v520 = vperm.slane %v518, 0
        %v522 = vmul.f32 %v439, %v520
        %v523 = vmul.f32 %v441, %v520
        %v524 = vmul.f32 %v444, %v520
        %v525 = vmul.f32 %v446, %v520
        %v526 = vmul.f32 %v449, %v520
        %v527 = vmul.f32 %v451, %v520
        %v528 = vmul.f32 %v454, %v520
        %v529 = vmul.f32 %v456, %v520
        %v530 = vmul.f32 %v459, %v520
        %v531 = vmul.f32 %v461, %v520
        %v532 = vmul.f32 %v464, %v520
        %v533 = vmul.f32 %v466, %v520
        %v534 = vmul.f32 %v469, %v520
        %v535 = vmul.f32 %v471, %v520
        %v536 = vmul.f32 %v474, %v520
        %v537 = vmul.f32 %v476, %v520
        %v538 = vmul.f32 %v479, %v520
        %v539 = vmul.f32 %v481, %v520
        %v540 = vmul.f32 %v484, %v520
        %v541 = vmul.f32 %v486, %v520
        %v542 = vmul.f32 %v489, %v520
        %v543 = vmul.f32 %v491, %v520
        %v544 = vmul.f32 %v494, %v520
        %v545 = vmul.f32 %v496, %v520
        %v546 = vmul.f32 %v499, %v520
        %v547 = vmul.f32 %v501, %v520
        %v548 = vmul.f32 %v504, %v520
        %v549 = vmul.f32 %v506, %v520
        %v550 = vmul.f32 %v509, %v520
        %v551 = vmul.f32 %v511, %v520
        %v552 = vmul.f32 %v514, %v520
        %v553 = vmul.f32 %v516, %v520
        %v554 = vld [vmem:[%s3] sm:$0x1]
        %v556 = vperm.slane %v554, 0
        %v558 = vadd.f32 %v522, %v556
        %v559 = vadd.f32 %v523, %v556
        %v560 = vadd.f32 %v524, %v556
        %v561 = vadd.f32 %v525, %v556
        %v562 = vadd.f32 %v526, %v556
        %v563 = vadd.f32 %v527, %v556
        %v564 = vadd.f32 %v528, %v556
        %v565 = vadd.f32 %v529, %v556
        %v566 = vadd.f32 %v530, %v556
        %v567 = vadd.f32 %v531, %v556
        %v568 = vadd.f32 %v532, %v556
        %v569 = vadd.f32 %v533, %v556
        %v570 = vadd.f32 %v534, %v556
        %v571 = vadd.f32 %v535, %v556
        %v572 = vadd.f32 %v536, %v556
        %v573 = vadd.f32 %v537, %v556
        %v574 = vadd.f32 %v538, %v556
        %v575 = vadd.f32 %v539, %v556
        %v576 = vadd.f32 %v540, %v556
        %v577 = vadd.f32 %v541, %v556
        %v578 = vadd.f32 %v542, %v556
        %v579 = vadd.f32 %v543, %v556
        %v580 = vadd.f32 %v544, %v556
        %v581 = vadd.f32 %v545, %v556
        %v582 = vadd.f32 %v546, %v556
        %v583 = vadd.f32 %v547, %v556
        %v584 = vadd.f32 %v548, %v556
        %v585 = vadd.f32 %v549, %v556
        %v586 = vadd.f32 %v550, %v556
        %v587 = vadd.f32 %v551, %v556
        %v588 = vadd.f32 %v552, %v556
        %v589 = vadd.f32 %v553, %v556
        %v590 = vmax.f32 %v558, 0.0
        %v591 = vmax.f32 %v559, 0.0
        %v592 = vmax.f32 %v560, 0.0
        %v593 = vmax.f32 %v561, 0.0
        %v594 = vmax.f32 %v562, 0.0
        %v595 = vmax.f32 %v563, 0.0
        %v596 = vmax.f32 %v564, 0.0
        %v597 = vmax.f32 %v565, 0.0
        %v598 = vmax.f32 %v566, 0.0
        %v599 = vmax.f32 %v567, 0.0
        %v600 = vmax.f32 %v568, 0.0
        %v601 = vmax.f32 %v569, 0.0
        %v602 = vmax.f32 %v570, 0.0
        %v603 = vmax.f32 %v571, 0.0
        %v604 = vmax.f32 %v572, 0.0
        %v605 = vmax.f32 %v573, 0.0
        %v606 = vmax.f32 %v574, 0.0
        %v607 = vmax.f32 %v575, 0.0
        %v608 = vmax.f32 %v576, 0.0
        %v609 = vmax.f32 %v577, 0.0
        %v610 = vmax.f32 %v578, 0.0
        %v611 = vmax.f32 %v579, 0.0
        %v612 = vmax.f32 %v580, 0.0
        %v613 = vmax.f32 %v581, 0.0
        %v614 = vmax.f32 %v582, 0.0
        %v615 = vmax.f32 %v583, 0.0
        %v616 = vmax.f32 %v584, 0.0
        %v617 = vmax.f32 %v585, 0.0
        %v618 = vmax.f32 %v586, 0.0
        %v619 = vmax.f32 %v587, 0.0
        %v620 = vmax.f32 %v588, 0.0
        %v621 = vmax.f32 %v589, 0.0
        %v622 = vpack.c.bf16 %v590, %v590
        %v623 = vpack.c.bf16 %v591, %v591
        %v624 = vpack.c.bf16 %v592, %v592
        %v625 = vpack.c.bf16 %v593, %v593
        %v626 = vpack.c.bf16 %v594, %v594
        %v627 = vpack.c.bf16 %v595, %v595
        %v628 = vpack.c.bf16 %v596, %v596
        %v629 = vpack.c.bf16 %v597, %v597
        %v630 = vpack.c.bf16 %v598, %v598
        %v631 = vpack.c.bf16 %v599, %v599
        %v632 = vpack.c.bf16 %v600, %v600
        %v633 = vpack.c.bf16 %v601, %v601
        %v634 = vpack.c.bf16 %v602, %v602
        %v635 = vpack.c.bf16 %v603, %v603
        %v636 = vpack.c.bf16 %v604, %v604
        %v637 = vpack.c.bf16 %v605, %v605
        %v638 = vpack.c.bf16 %v606, %v606
        %v639 = vpack.c.bf16 %v607, %v607
        %v640 = vpack.c.bf16 %v608, %v608
        %v641 = vpack.c.bf16 %v609, %v609
        %v642 = vpack.c.bf16 %v610, %v610
        %v643 = vpack.c.bf16 %v611, %v611
        %v644 = vpack.c.bf16 %v612, %v612
        %v645 = vpack.c.bf16 %v613, %v613
        %v646 = vpack.c.bf16 %v614, %v614
        %v647 = vpack.c.bf16 %v615, %v615
        %v648 = vpack.c.bf16 %v616, %v616
        %v649 = vpack.c.bf16 %v617, %v617
        %v650 = vpack.c.bf16 %v618, %v618
        %v651 = vpack.c.bf16 %v619, %v619
        %v652 = vpack.c.bf16 %v620, %v620
        %v653 = vpack.c.bf16 %v621, %v621
        %654 = vst [vmem:[%s234] sm:$0xf] %v622
        %655 = vst [vmem:[%s234 + $0x4] sm:$0xf] %v623
        %656 = vst [vmem:[%s234 + $0x8] sm:$0xf] %v624
        %657 = vst [vmem:[%s234 + $0xc] sm:$0xf] %v625
        %658 = vst [vmem:[%s234 + $0x10] sm:$0xf] %v626
        %659 = vst [vmem:[%s234 + $0x14] sm:$0xf] %v627
        %660 = vst [vmem:[%s234 + $0x18] sm:$0xf] %v628
        %661 = vst [vmem:[%s234 + $0x1c] sm:$0xf] %v629
        %662 = vst [vmem:[%s234 + $0x20] sm:$0xf] %v630
        %663 = vst [vmem:[%s234 + $0x24] sm:$0xf] %v631
        %664 = vst [vmem:[%s234 + $0x28] sm:$0xf] %v632
        %665 = vst [vmem:[%s234 + $0x2c] sm:$0xf] %v633
        %666 = vst [vmem:[%s234 + $0x30] sm:$0xf] %v634
        %667 = vst [vmem:[%s234 + $0x34] sm:$0xf] %v635
        %668 = vst [vmem:[%s234 + $0x38] sm:$0xf] %v636
        %669 = vst [vmem:[%s234 + $0x3c] sm:$0xf] %v637
        %670 = vst [vmem:[%s234 + $0x40] sm:$0xf] %v638
        %671 = vst [vmem:[%s234 + $0x44] sm:$0xf] %v639
        %672 = vst [vmem:[%s234 + $0x48] sm:$0xf] %v640
        %673 = vst [vmem:[%s234 + $0x4c] sm:$0xf] %v641
        %674 = vst [vmem:[%s234 + $0x50] sm:$0xf] %v642
        %675 = vst [vmem:[%s234 + $0x54] sm:$0xf] %v643
        %676 = vst [vmem:[%s234 + $0x58] sm:$0xf] %v644
        %677 = vst [vmem:[%s234 + $0x5c] sm:$0xf] %v645
        %678 = vst [vmem:[%s234 + $0x60] sm:$0xf] %v646
        %679 = vst [vmem:[%s234 + $0x64] sm:$0xf] %v647
        %680 = vst [vmem:[%s234 + $0x68] sm:$0xf] %v648
        %681 = vst [vmem:[%s234 + $0x6c] sm:$0xf] %v649
        %682 = vst [vmem:[%s234 + $0x70] sm:$0xf] %v650
        %683 = vst [vmem:[%s234 + $0x74] sm:$0xf] %v651
        %684 = vst [vmem:[%s234 + $0x78] sm:$0xf] %v652
        %685 = vst [vmem:[%s234 + $0x7c] sm:$0xf] %v653
        %s686 = sand.u32 %s119, 1
        %s687 = scalar_lea.sflag [#allocation4], %s686
        %s688 = sand.u32 %s119, 1
        %s689 = smul.addr %s688, 128
        %s690 = scalar_lea.vmem [#allocation7], %s689
        // Predicated region
        $region45: #{tpu_custom_call.1} parent=35 // pred_check
          %p691 = pneg %p129
        $region46: #{tpu_custom_call.1} parent=35 // pred_check_branch
          %693 = sbr.rel (%p691) target = $region48
        $region47: #{tpu_custom_call.1} parent=35 // pred_region
          %s694 = smul.u32 32, %s22
          %696 = vsyncadd %s687, 0
          %s697 = smul.addr %s694, 4
          %s698 = scalar_lea.hbm %s4, %s697
          %s699 = sshll.u32 %s690, 4
          %s700 = int_to_ptr.vmem [resolvable:$true] %s699
          %s701 = sshll.u32 %s698, 4
          %s702 = int_to_ptr.hbm [resolvable:$true] %s701
          %707 = dma.vmem_to_hbm [thread:$0]  %s700, 2048, %s702, %s687, 64, 64, 4
        $region48: #{tpu_custom_call.1} parent=35 // pred_fallthru
          _
      $region36: #{tpu_custom_call.1} parent=5 // pred_fallthru
        _
      %p708 = scmp.le.s32.totalorder 2, %s17
      // Predicated region
      $region49: #{tpu_custom_call.1} parent=5 // pred_check
        %p709 = pneg %p708
      $region50: #{tpu_custom_call.1} parent=5 // pred_check_branch
        %711 = sbr.rel (%p709) target = $region52
      $region51: #{tpu_custom_call.1} parent=5 // pred_region
        %s712 = ssub.s32 %s17, 2
        // Predicated region
        $region53: #{tpu_custom_call.1} parent=51 // pred_check
          %p713 = pneg %p135
        $region54: #{tpu_custom_call.1} parent=51 // pred_check_branch
          %715 = sbr.rel (%p713) target = $region56
        $region55: #{tpu_custom_call.1} parent=51 // pred_region
          %s716 = sand.u32 %s120, 1
          %s717 = scalar_lea.sflag [#allocation4], %s716
          %s718 = sand.u32 %s120, 1
          %s719 = smul.addr %s718, 128
          %s720 = scalar_lea.vmem [#allocation7], %s719
          %722 = dma.done %s717, 2048
        $region56: #{tpu_custom_call.1} parent=51 // pred_fallthru
          _
      $region52: #{tpu_custom_call.1} parent=5 // pred_fallthru
        _
    $region6: #{tpu_custom_call.1} parent=1 // loop_footer
      %s21 = sadd.s32 1, %s17
    $region7: #{tpu_custom_call.1} parent=1 // loop_footer_branch
      %16 = sbr.rel target = $region3
    $region8: #{tpu_custom_call.1} parent=1 // loop_exit
      _
    %723 = vsyncpa [#allocation3], 1
    %s724 = scalar_lea.sflag [#allocation3], 1
    %725 = vsyncpa %s724, 1
    %726 = vsyncpa [#allocation6], 1
    %727 = vsyncpa [#allocation4], 1
    %s728 = scalar_lea.sflag [#allocation4], 1
    %729 = vsyncpa %s728, 1

</llo_original>
